<compile_context>
chip_gen: v5e
topology: v5e:2x2
jax: 0.10.0
libtpu: 0.0.40
codegen_flags: <defaults>
</compile_context>

<pallas_src>
import numpy as np
import jax
import jax.numpy as jnp
from jax.experimental import pallas as pl
from jax.experimental.pallas import tpu as pltpu

POOL_SIZES = (1, 2, 3, 6)
ENC_LEN = sum(s * s for s in POOL_SIZES)   # 50
ENC_PAD = 64                               # padded "semantic" axis (clean vreg boundaries)
NEG_INF = -1e30
VMEM_LIMIT = 48 * 1024 * 1024              # > 16/32 MiB defaults, < v7x 64 MiB physical


# ----------------------------- setup glue (plain JAX / numpy) -----------------------------

def adaptive_pool_matrix(h, w):
    """(h*w, 50) matrix so that  x_flat @ P == concat_s AdaptiveAvgPool2d(s)(x).flatten()."""
    cols = []
    for s in POOL_SIZES:
        P = np.zeros((h * w, s * s), dtype=np.float32)
        for i in range(s):
            r0, r1 = (i * h) // s, -(-((i + 1) * h) // s)
            for j in range(s):
                c0, c1 = (j * w) // s, -(-((j + 1) * w) // s)
                cnt = float((r1 - r0) * (c1 - c0))
                for r in range(r0, r1):
                    for c in range(c0, c1):
                        P[r * w + c, i * s + j] = 1.0 / cnt
        cols.append(P)
    return np.concatenate(cols, axis=1)


def scale_masks():
    m = np.zeros((len(POOL_SIZES), 1, ENC_LEN), dtype=np.float32)
    off = 0
    for k, s in enumerate(POOL_SIZES):
        m[k, 0, off:off + s * s] = 1.0
        off += s * s
    return m


def init_params(key, xin, yin, mid, h, w, hy, wy):
    """Canonical f32 parameters (1x1 convs + eval-mode BN folded into affine weights)."""
    eps = 1e-5
    keys = iter(jax.random.split(key, 64))
    nrm = lambda shape, s=0.1: s * jax.random.normal(next(keys), shape, jnp.float32)

    def bn(n):
        gamma = 1.0 + 0.1 * jax.random.normal(next(keys), (n,), jnp.float32)
        beta = 0.05 * jax.random.normal(next(keys), (n,), jnp.float32)
        mean = 0.1 * jax.random.normal(next(keys), (n,), jnp.float32)
        var = jax.random.uniform(next(keys), (n,), jnp.float32, 0.5, 1.5)
        s = gamma / jnp.sqrt(var + eps)
        t = beta - s * mean
        return s, t  # y = s * x + t   (eval-mode BN folded to affine)

    def enc_params(cin):
        # CPAMEnc: per pooled scale, conv1x1(no bias)+BN(+ReLU in kernel), then Linear(50,50)
        Ws, Bcols = [], []
        for s_pool in POOL_SIZES:
            Wc = nrm((cin, cin))
            sc, sh = bn(cin)
            Ws.append(sc[:, None] * Wc)
            Bcols.append(jnp.broadcast_to(sh[:, None], (cin, s_pool * s_pool)))
        Wenc = jnp.stack(Ws, 0)                  # (4, cin, cin)
        Benc = jnp.concatenate(Bcols, axis=1)    # (cin, 50)
        Wlin = nrm((ENC_LEN, ENC_LEN))           # nn.Linear(50, 50)
        blin = nrm((ENC_LEN,), 0.05)
        return Wenc, Benc, Wlin.T, blin.reshape(1, ENC_LEN)

    w_self_enc, b_self_enc, a_self_T, b_lin_self = enc_params(xin)
    w_y_enc, b_y_enc, a_y_T, b_lin_y = enc_params(yin)

    # f_x: conv(xin->mid,no bias)+BN+conv(mid->mid,no bias)+BN -> all affine, fold to one.
    W1 = nrm((mid, xin)); s1, t1 = bn(mid)
    W2 = nrm((mid, mid)); s2, t2 = bn(mid)
    W2e = s2[:, None] * W2
    w_fx = W2e @ (s1[:, None] * W1)
    b_fx = (W2e @ t1 + t2).reshape(mid, 1)

    # f_up: conv(mid->xin,no bias)+BN(xin).
    # NOTE: PyTorch __init__ zeroes the f_up BN gamma/bias (so out == x at init); we use
    # non-zero deterministic values so the attention path is actually exercised.
    Wu = nrm((xin, mid)); su, tu = bn(xin)
    w_up = su[:, None] * Wu
    b_up = tu.reshape(xin, 1)

    return dict(
        px=jnp.asarray(adaptive_pool_matrix(h, w)),
        py=jnp.asarray(adaptive_pool_matrix(hy, wy)),
        mask=jnp.asarray(scale_masks()),
        w_self_enc=w_self_enc, b_self_enc=b_self_enc,
        a_self_T=a_self_T, b_lin_self=b_lin_self,
        w_y_enc=w_y_enc, b_y_enc=b_y_enc, a_y_T=a_y_T, b_lin_y=b_lin_y,
        w_fx=w_fx, b_fx=b_fx, w_up=w_up, b_up=b_up)


def prepare_kernel_params(params, mid, scale):
    """Pad ENC axis 50->64, hstack per-scale encoder weights, cast matmul weights to bf16,
    fold the optional mid**-0.5 scale into w_fx/b_fx; b_fx is stored as a row vector."""
    pad_n = ENC_PAD - ENC_LEN

    def pad_cols(a):
        return jnp.pad(a, [(0, 0)] * (a.ndim - 1) + [(0, pad_n)])

    w_fx, b_fx = params["w_fx"], params["b_fx"]          # (mid, xin), (mid, 1)
    if scale:
        sc = mid ** -0.5
        w_fx = w_fx * sc
        b_fx = b_fx * sc

    # -1e30 on padded ENC rows kills them in the softmax; folded into b_sim (kept f32).
    nbias = jnp.concatenate(
        [jnp.zeros((ENC_LEN, 1), jnp.float32),
         jnp.full((pad_n, 1), NEG_INF, jnp.float32)], axis=0)        # (64, 1)

    def hstack_w(w4):  # (4, C, C) -> (C, 4C)
        return jnp.concatenate([w4[k] for k in range(len(POOL_SIZES))], axis=1)

    return dict(
        px=pad_cols(params["px"]).astype(jnp.bfloat16),              # (HW, 64)
        py=pad_cols(params["py"]).astype(jnp.bfloat16),              # (HWy, 64)
        mask=pad_cols(params["mask"]).astype(jnp.bfloat16),          # (4, 1, 64), exact 0/1
        w_self_h=hstack_w(params["w_self_enc"]).astype(jnp.bfloat16),
        b_self_enc=pad_cols(params["b_self_enc"]),                   # (C, 64) f32
        a_self_T=jnp.pad(params["a_self_T"], ((0, pad_n), (0, pad_n))).astype(jnp.bfloat16),
        b_lin_self=pad_cols(params["b_lin_self"]),                   # (1, 64) f32
        w_y_h=hstack_w(params["w_y_enc"]).astype(jnp.bfloat16),
        b_y_enc=pad_cols(params["b_y_enc"]),
        a_y_T=jnp.pad(params["a_y_T"], ((0, pad_n), (0, pad_n))).astype(jnp.bfloat16),
        b_lin_y=pad_cols(params["b_lin_y"]),
        w_fx=w_fx.astype(jnp.bfloat16),                              # (mid, C) bf16
        b_fx=b_fx.reshape(1, mid).astype(jnp.float32),               # (1, mid) f32 row
        w_up=params["w_up"].astype(jnp.bfloat16),                    # (C, mid) bf16
        b_up=params["b_up"],                                         # (C, 1) f32
        nbias=nbias)


def _round_up(n, m):
    return -(-n // m) * m


def _pick_tile(hw_pad, prefs):
    for t in prefs:
        if hw_pad % t == 0:
            return t
    return 128  # hw_pad is always a multiple of 128


# ----------------------------------- Pallas kernels ----------------------------------------

def cpam_pool_kernel(feat_ref, p_ref, pooled_ref):
    """Adaptive-avg-pool as a matmul, accumulated over HW tiles into the resident output."""
    @pl.when(pl.program_id(1) == 0)
    def _():
        pooled_ref[...] = jnp.zeros_like(pooled_ref)
    pooled_ref[...] += jnp.dot(feat_ref[...], p_ref[...],
                               preferred_element_type=jnp.float32)


def cpam_fold_kernel(pooled_x_ref, pooled_y_ref, mask_ref,
                     wsh_ref, bse_ref, ase_ref, blse_ref,
                     wyh_ref, bye_ref, aye_ref, blye_ref,
                     wfx_ref, bfx_ref, wup_ref, nbias_ref,
                     wsim_ref, bsim_ref, wout_ref):
    """Per-batch CPAMEnc + Linear for x and y, then algebraic fold:
       W_sim = fy^T @ w_fx, b_sim = fy^T @ b_fx + nbias, W_out = w_up @ fself."""

    def encode(pooled_f32, wh_ref, benc_ref, aT_ref, blin_ref):
        pooled = pooled_f32.astype(jnp.bfloat16)                              # (C, 64)
        # 4 per-scale conv+BN matmuls fused into a single K=4C matmul against
        # mask-stacked pooled features.
        stacked = jnp.concatenate(
            [pooled * mask_ref[k] for k in range(len(POOL_SIZES))], axis=0)   # (4C, 64) bf16
        acc = jnp.dot(wh_ref[...], stacked, preferred_element_type=jnp.float32)
        feat = jnp.maximum(acc + benc_ref[...], 0.0)
        return jnp.dot(feat.astype(jnp.bfloat16), aT_ref[...],
                       preferred_element_type=jnp.float32) + blin_ref[...]    # (C, 64) f32

    fself = encode(pooled_x_ref[...], wsh_ref, bse_ref, ase_ref, blse_ref)    # (C, 64)
    fy = encode(pooled_y_ref[...], wyh_ref, bye_ref, aye_ref, blye_ref)       # (Cy, 64)

    fy_t = fy.T                                                               # (64, Cy), tiny XLU
    wsim_ref[...] = jnp.dot(fy_t.astype(jnp.bfloat16), wfx_ref[...],
                            preferred_element_type=jnp.float32).astype(wsim_ref.dtype)
    # b_sim = fy^T @ b_fx + nbias  (lane reduction; padded ENC rows get -1e30, kept f32)
    bsim_ref[...] = jnp.sum(fy_t * bfx_ref[...], axis=1, keepdims=True) + nbias_ref[...]
    wout_ref[...] = jnp.dot(wup_ref[...], fself.astype(jnp.bfloat16),
                            preferred_element_type=jnp.float32).astype(wout_ref.dtype)


def cpam_attn_kernel(x_ref, wsim_ref, bsim_ref, wout_ref, bup_ref, out_ref):
    """Streaming attention / residual for one (batch, HW-tile) block.
    sim is transposed & lane-dense: (ENC_PAD, T) with HW on lanes; softmax over axis 0."""
    x = x_ref[...]                                                            # (C, T) bf16

    sim_t = jnp.dot(wsim_ref[...], x,
                    preferred_element_type=jnp.float32) + bsim_ref[...]       # (64, T) f32
    sim_t = sim_t - jnp.max(sim_t, axis=0, keepdims=True)
    e = jnp.exp(sim_t)
    sm = e * pl.reciprocal(jnp.sum(e, axis=0, keepdims=True), approx=True)

    up = jnp.dot(wout_ref[...], sm.astype(jnp.bfloat16),
                 preferred_element_type=jnp.float32) + bup_ref[...]           # (C, T) f32
    # Residual add in f32, store bf16 (bf16 x + bf16 output rounding is documented,
    # within test tolerance).
    out_ref[...] = (x.astype(jnp.float32) + up).astype(out_ref.dtype)


# --------------------------------------- wrapper -------------------------------------------

def _pool(feat, p_mat, tile):
    B, C, hw_pad = feat.shape
    n_t = hw_pad // tile
    return pl.pallas_call(
        cpam_pool_kernel,
        out_shape=jax.ShapeDtypeStruct((B, C, ENC_PAD), jnp.float32),
        grid_spec=pltpu.PrefetchScalarGridSpec(
            num_scalar_prefetch=0, grid=(B, n_t),
            in_specs=[pl.BlockSpec((None, C, tile), lambda b, t: (b, 0, t)),
                      pl.BlockSpec((tile, ENC_PAD), lambda b, t: (t, 0))],
            out_specs=pl.BlockSpec((None, C, ENC_PAD), lambda b, t: (b, 0, 0))),
        compiler_params=pltpu.CompilerParams(
            dimension_semantics=("parallel", "arbitrary"),
            vmem_limit_bytes=VMEM_LIMIT),
    )(feat, p_mat)


def _fold(pooled_x, pooled_y, kp):
    B, C, _ = pooled_x.shape
    _, Cy, _ = pooled_y.shape
    const = lambda a: pl.BlockSpec(a.shape, lambda b, _n=a.ndim: (0,) * _n)
    args = (pooled_x, pooled_y, kp["mask"],
            kp["w_self_h"], kp["b_self_enc"], kp["a_self_T"], kp["b_lin_self"],
            kp["w_y_h"], kp["b_y_enc"], kp["a_y_T"], kp["b_lin_y"],
            kp["w_fx"], kp["b_fx"], kp["w_up"], kp["nbias"])
    in_specs = [pl.BlockSpec((None, C, ENC_PAD), lambda b: (b, 0, 0)),
                pl.BlockSpec((None, Cy, ENC_PAD), lambda b: (b, 0, 0))] + \
               [const(a) for a in args[2:]]
    return pl.pallas_call(
        cpam_fold_kernel,
        out_shape=(jax.ShapeDtypeStruct((B, ENC_PAD, C), jnp.bfloat16),   # W_sim
                   jax.ShapeDtypeStruct((B, ENC_PAD, 1), jnp.float32),    # b_sim (incl. nbias)
                   jax.ShapeDtypeStruct((B, C, ENC_PAD), jnp.bfloat16)),  # W_out
        grid_spec=pltpu.PrefetchScalarGridSpec(
            num_scalar_prefetch=0, grid=(B,),
            in_specs=in_specs,
            out_specs=(pl.BlockSpec((None, ENC_PAD, C), lambda b: (b, 0, 0)),
                       pl.BlockSpec((None, ENC_PAD, 1), lambda b: (b, 0, 0)),
                       pl.BlockSpec((None, C, ENC_PAD), lambda b: (b, 0, 0)))),
        compiler_params=pltpu.CompilerParams(
            dimension_semantics=("parallel",),
            vmem_limit_bytes=VMEM_LIMIT),
    )(*args)


def _attn(x_flat, w_sim, b_sim, w_out, b_up, tile):
    B, C, hw_pad = x_flat.shape
    n_t = hw_pad // tile
    return pl.pallas_call(
        cpam_attn_kernel,
        out_shape=jax.ShapeDtypeStruct((B, C, hw_pad), jnp.bfloat16),
        grid_spec=pltpu.PrefetchScalarGridSpec(
            num_scalar_prefetch=0, grid=(B, n_t),
            in_specs=[pl.BlockSpec((None, C, tile), lambda b, t: (b, 0, t)),
                      pl.BlockSpec((None, ENC_PAD, C), lambda b, t: (b, 0, 0)),
                      pl.BlockSpec((None, ENC_PAD, 1), lambda b, t: (b, 0, 0)),
                      pl.BlockSpec((None, C, ENC_PAD), lambda b, t: (b, 0, 0)),
                      pl.BlockSpec(b_up.shape, lambda b, t: (0, 0))],
            out_specs=pl.BlockSpec((None, C, tile), lambda b, t: (b, 0, t))),
        compiler_params=pltpu.CompilerParams(
            dimension_semantics=("parallel", "parallel"),
            vmem_limit_bytes=VMEM_LIMIT),
    )(x_flat, w_sim, b_sim, w_out, b_up)


def cpam_dec(x, y, params, *, scale=False):
    B, C, H, W = x.shape
    _, Cy, Hy, Wy = y.shape
    HW, HWy = H * W, Hy * Wy
    mid = params["w_fx"].shape[0]

    kp = prepare_kernel_params(params, mid, scale)

    # Flatten NCHW -> (B, C, HW) bf16 and pad HW to a multiple of 128 (lane-dense tiles).
    hw_pad, hwy_pad = _round_up(HW, 128), _round_up(HWy, 128)
    x_flat = jnp.pad(x.reshape(B, C, HW).astype(jnp.bfloat16),
                     ((0, 0), (0, 0), (0, hw_pad - HW)))
    y_flat = jnp.pad(y.reshape(B, Cy, HWy).astype(jnp.bfloat16),
                     ((0, 0), (0, 0), (0, hwy_pad - HWy)))
    px = jnp.pad(kp["px"], ((0, hw_pad - HW), (0, 0)))
    py = jnp.pad(kp["py"], ((0, hwy_pad - HWy), (0, 0)))

    # Pass 1: channel pooling (adaptive avg pools as one matmul), HW-tiled accumulation.
    pool_prefs = (2048, 1024, 512, 256, 128)
    pooled_x = _pool(x_flat, px, _pick_tile(hw_pad, pool_prefs))
    pooled_y = _pool(y_flat, py, _pick_tile(hwy_pad, pool_prefs))

    # Pass 2: tiny per-batch encoders + algebraic fold of w_fx / w_up into W_sim / W_out.
    w_sim, b_sim, w_out = _fold(pooled_x, pooled_y, kp)

    # Pass 3: streaming attention + residual over HW tiles (bf16 output).
    out = _attn(x_flat, w_sim, b_sim, w_out, kp["b_up"],
                _pick_tile(hw_pad, (1024, 512, 256, 128)))
    return out[:, :, :HW].reshape(B, C, H, W)   # bf16


# ------------------------------- pure-JAX f32 reference ------------------------------------

def cpam_dec_reference(x, y, params, *, scale=False):
    B, C, H, W = x.shape
    _, Cy, Hy, Wy = y.shape
    x_flat = x.reshape(B, C, H * W)
    y_flat = y.reshape(B, Cy, Hy * Wy)
    mid = params["w_fx"].shape[0]

    def enc(f, P, Wenc, Benc, AT, bl):
        pooled = jnp.einsum("bcp,pe->bce", f, P)
        acc = jnp.zeros_like(pooled)
        for s in range(len(POOL_SIZES)):
            acc = acc + jnp.einsum("oc,bce->boe", Wenc[s], pooled) * params["mask"][s][None]
        feat = jnp.maximum(acc + Benc[None], 0.0)
        return jnp.einsum("bce,ef->bcf", feat, AT) + bl[None]

    fself = enc(x_flat, params["px"], params["w_self_enc"], params["b_self_enc"],
                params["a_self_T"], params["b_lin_self"])
    fy = enc(y_flat, params["py"], params["w_y_enc"], params["b_y_enc"],
             params["a_y_T"], params["b_lin_y"])
    fx = jnp.einsum("mc,bcp->bmp", params["w_fx"], x_flat) + params["b_fx"][None]
    sim = jnp.einsum("bmp,bme->bpe", fx, fy)
    if scale:
        sim = sim * (mid ** -0.5)
    sm = jax.nn.softmax(sim, axis=-1)
    foutT = jnp.einsum("bce,bpe->bcp", fself, sm)
    up = jnp.einsum("cm,bmp->bcp", params["w_up"], foutT) + params["b_up"][None]
    return (x_flat + up).reshape(B, C, H, W)


# ------------------------------------------ main -------------------------------------------

if __name__ == "__main__":
    key = jax.random.PRNGKey(0)
    kx, ky, kparam = jax.random.split(key, 3)

    # The module's shape algebra forces xin_channels == yin_channels == mid_channels.
    B, C, H, W = 2, 8, 12, 12          # HW=144 -> padded to 256 (exercises padding path)
    Hy, Wy = 6, 6                      # HWy=36 -> padded to 128
    mid = C

    x = jax.random.normal(kx, (B, C, H, W), jnp.float32)
    y = jax.random.normal(ky, (B, C, Hy, Wy), jnp.float32)
    params = init_params(kparam, C, C, mid, H, W, Hy, Wy)

    out = cpam_dec(x, y, params, scale=False)
    out = jax.block_until_ready(out)

    ref = cpam_dec_reference(x, y, params, scale=False)
    # bf16 MXU inputs + bf16 output (f32 accumulation / residual) => loose tolerance.
    np.testing.assert_allclose(np.asarray(out).astype(np.float32), np.asarray(ref),
                               rtol=2e-2, atol=2e-2)
    print("KERNEL_OK")
</pallas_src>

<mosaic_0001>
module attributes {stable_mosaic.version = 11 : i64} {
  func.func @cpam_pool_kernel(%arg0: i32, %arg1: i32, %arg2: memref<1x8x256xbf16, #tpu.memory_space<vmem>>, %arg3: memref<256x64xbf16, #tpu.memory_space<vmem>>, %arg4: memref<1x8x64xf32, #tpu.memory_space<vmem>>) attributes {dimension_semantics = [#tpu.dimension_semantics<parallel>, #tpu.dimension_semantics<arbitrary>], iteration_bounds = array<i64: 2, 1>, scalar_prefetch = 0 : i64, scratch_operands = 0 : i64, tpu.core_type = #tpu.core_type<tc>, window_params = [{transform_indices = @transform_0, window_bounds = array<i64: 1, 8, 256>}, {transform_indices = @transform_1, window_bounds = array<i64: 256, 64>}, {transform_indices = @transform_2, window_bounds = array<i64: 1, 8, 64>}]} {
    %c0_i32 = arith.constant 0 : i32
    %0 = arith.cmpi eq, %arg1, %c0_i32 : i32
    %1 = arith.extui %0 : i1 to i32
    %c0_i32_0 = arith.constant 0 : i32
    %2 = arith.cmpi ne, %1, %c0_i32_0 : i32
    scf.if %2 {
      %cst_11 = arith.constant 0.000000e+00 : f32
      %13 = vector.broadcast %cst_11 : f32 to vector<8x64xf32>
      %c0_12 = arith.constant 0 : index
      %c0_13 = arith.constant 0 : index
      %c0_14 = arith.constant 0 : index
      %14 = vector.load %arg4[%c0_12, %c0_13, %c0_14] : memref<1x8x64xf32, #tpu.memory_space<vmem>>, vector<1x8x64xf32>
      %15 = vector.shape_cast %14 : vector<1x8x64xf32> to vector<8x64xf32>
      %16 = vector.shape_cast %13 : vector<8x64xf32> to vector<1x8x64xf32>
      tpu.vector_store %arg4[%c0_12, %c0_13, %c0_14], %16 {strides = array<i32>} : memref<1x8x64xf32, #tpu.memory_space<vmem>>, vector<1x8x64xf32>,
    } else {
    }
    %c0 = arith.constant 0 : index
    %c0_1 = arith.constant 0 : index
    %c0_2 = arith.constant 0 : index
    %3 = vector.load %arg4[%c0, %c0_1, %c0_2] : memref<1x8x64xf32, #tpu.memory_space<vmem>>, vector<1x8x64xf32>
    %4 = vector.shape_cast %3 : vector<1x8x64xf32> to vector<8x64xf32>
    %c0_3 = arith.constant 0 : index
    %c0_4 = arith.constant 0 : index
    %c0_5 = arith.constant 0 : index
    %5 = vector.load %arg2[%c0_3, %c0_4, %c0_5] : memref<1x8x256xbf16, #tpu.memory_space<vmem>>, vector<1x8x256xbf16>
    %6 = vector.shape_cast %5 : vector<1x8x256xbf16> to vector<8x256xbf16>
    %c0_6 = arith.constant 0 : index
    %c0_7 = arith.constant 0 : index
    %7 = vector.load %arg3[%c0_6, %c0_7] : memref<256x64xbf16, #tpu.memory_space<vmem>>, vector<256x64xbf16>
    %cst = arith.constant dense<0.000000e+00> : vector<8x64xf32>
    %8 = tpu.matmul %6, %7, %cst {dimension_numbers = #tpu.dot_dimension_numbers<[1], [0], [0], [1], [0, 0, 1, 1], [], []>} : vector<8x256xbf16>, vector<256x64xbf16>, vector<8x64xf32> -> vector<8x64xf32>
    %9 = arith.addf %4, %8 : vector<8x64xf32>
    %c0_8 = arith.constant 0 : index
    %c0_9 = arith.constant 0 : index
    %c0_10 = arith.constant 0 : index
    %10 = vector.load %arg4[%c0_8, %c0_9, %c0_10] : memref<1x8x64xf32, #tpu.memory_space<vmem>>, vector<1x8x64xf32>
    %11 = vector.shape_cast %10 : vector<1x8x64xf32> to vector<8x64xf32>
    %12 = vector.shape_cast %9 : vector<8x64xf32> to vector<1x8x64xf32>
    tpu.vector_store %arg4[%c0_8, %c0_9, %c0_10], %12 {strides = array<i32>} : memref<1x8x64xf32, #tpu.memory_space<vmem>>, vector<1x8x64xf32>,
    return
  }
  func.func @transform_0(%arg0: i32, %arg1: i32) -> (i32, i32, i32) {
    %c0_i32 = arith.constant 0 : i32
    %c0_i32_0 = arith.constant 0 : i32
    return %arg0, %c0_i32, %arg1 : i32, i32, i32
  }
  func.func @transform_1(%arg0: i32, %arg1: i32) -> (i32, i32) {
    %c0_i32 = arith.constant 0 : i32
    %c0_i32_0 = arith.constant 0 : i32
    return %arg1, %c0_i32 : i32, i32
  }
  func.func @transform_2(%arg0: i32, %arg1: i32) -> (i32, i32, i32) {
    %c0_i32 = arith.constant 0 : i32
    %c0_i32_0 = arith.constant 0 : i32
    %c0_i32_1 = arith.constant 0 : i32
    return %arg0, %c0_i32, %c0_i32_0 : i32, i32, i32
  }
}

</mosaic_0001>

<llo_original>
// kernel: tpu_custom_call.1
$region0: #{tpu_custom_call.1}
  #allocation0 [shape = 'u32[]', space=smem, size = 0x4, offset = 0x4, fixed_abs, tag = 'smem constant byte address 0x4 - core index']
  #allocation1 [shape = 'u32[72,128]{1,0:T(1,128)}', space=vmem, size = 0x9000, scoped, tag = 'internal scratch']
  %s0 = inlined_call_operand.vmem [shape: bf16[2,8,256], index: 0, kind: input, shape index: {}]
  %s1 = inlined_call_operand.vmem [shape: bf16[256,64], index: 1, kind: input, shape index: {}]
  %s2 = inlined_call_operand.hbm [shape: f32[2,8,64], index: 2, kind: output, shape index: {}]
  %s3 = sld [smem:[#allocation0]]
  $region45: #{tpu_custom_call.1} parent=0
    _
  %s5 = ssub.s32 1, %s3
  %s6 = scalar_select 0, %s5, %s3
  $region1: #{tpu_custom_call.1} parent=0
    #allocation2 [shape = 'u8[8192]{0}', space=vmem, size = 0x2000, scoped, tag = 'output window, operand 0']
    #allocation3 [shape = 's32[2]{0}', space=sflag, size = 0x8, scoped, tag = 'scoped memory for tpu_custom_call.1']
    %7 = vsyncpa [#allocation3], 0
    %s8 = scalar_lea.sflag [#allocation3], 1
    %9 = vsyncpa %s8, 0
    loop: start=0, step=1, limit=4
    $region2: #{tpu_custom_call.1} parent=1 // loop_pre_header
      _
    $region3: #{tpu_custom_call.1} parent=1 // loop_header
      %s11 = sphi 0, %s15
      %p12 = scmp.ge.s32.totalorder %s11, 4
      %s18 = sphi 0, %s30
      %s19 = sphi 0, %s26
      %s20 = sphi 0, %s18
      %s21 = sphi 0, %s19
      %s22 = sphi 0, %s20
      %s23 = sphi 0, %s21
      %s35 = sphi 0, %s37
      %s38 = sphi 0, %s35
      %s39 = sphi 0, %s38
      %s55 = sphi 0, %s39
      %s61 = sphi 0, %s63
      %s64 = sphi 0, %s61
      %s65 = sphi 0, %s64
      %s81 = sphi 0, %s65
      %s87 = sphi 0, %s89
      %s90 = sphi 0, %s87
      %s91 = sphi 0, %s90
      %s107 = sphi 0, %s91
    $region4: #{tpu_custom_call.1} parent=1 // loop_header_branch
      %14 = sbr.rel (%p12) target = $region8
    $region5: #{tpu_custom_call.1} parent=1 // loop_body
      %s16 = ssub.s32 %s11, 1
      %s17 = ssub.s32 %s11, 2
      %s24 = sadd.s32 1, %s19
      %p25 = scmp.ge.s32.totalorder %s24, 1
      %s26 = scalar_select %p25, 0, %s24
      %s27 = sadd.s32 1, %s18
      %s28 = scalar_select %p25, %s27, %s18
      %p29 = scmp.ge.s32.totalorder %s28, 2
      %s30 = scalar_select %p29, 0, %s28
      %s31 = ssub.s32 %s18, %s30
      %s32 = ssub.s32 %s19, %s26
      %s33 = sor.u32 %s31, %s32
      %p34 = scmp.eq.s32.totalorder %s33, 0
      %s36 = sadd.s32 %s35, 1
      %s37 = scalar_select %p34, %s35, %s36
      %p40 = pneg %p34
      %p41 = scmp.eq.s32.totalorder %s11, 1
      %p42 = por %p40, %p41
      %p43 = scmp.ne.s32.totalorder %s35, %s38
      %p44 = scmp.eq.s32.totalorder %s11, 0
      %p45 = por %p43, %p44
      %p46 = scmp.ne.s32.totalorder %s35, %s38
      %p47 = scmp.eq.s32.totalorder %s16, 1
      %p48 = por %p46, %p47
      %p49 = scmp.ne.s32.totalorder %s38, %s39
      %p50 = scmp.eq.s32.totalorder %s16, 0
      %p51 = por %p49, %p50
      %p52 = scmp.ne.s32.totalorder %s38, %s39
      %p53 = scmp.eq.s32.totalorder %s17, 1
      %p54 = por %p52, %p53
      %p56 = scmp.ne.s32.totalorder %s39, %s55
      %p57 = scmp.eq.s32.totalorder %s17, 0
      %p58 = por %p56, %p57
      %s59 = ssub.s32 %s19, %s26
      %p60 = scmp.eq.s32.totalorder %s59, 0
      %s62 = sadd.s32 %s61, 1
      %s63 = scalar_select %p60, %s61, %s62
      %p66 = pneg %p60
      %p67 = scmp.eq.s32.totalorder %s11, 1
      %p68 = por %p66, %p67
      %p69 = scmp.ne.s32.totalorder %s61, %s64
      %p70 = scmp.eq.s32.totalorder %s11, 0
      %p71 = por %p69, %p70
      %p72 = scmp.ne.s32.totalorder %s61, %s64
      %p73 = scmp.eq.s32.totalorder %s16, 1
      %p74 = por %p72, %p73
      %p75 = scmp.ne.s32.totalorder %s64, %s65
      %p76 = scmp.eq.s32.totalorder %s16, 0
      %p77 = por %p75, %p76
      %p78 = scmp.ne.s32.totalorder %s64, %s65
      %p79 = scmp.eq.s32.totalorder %s17, 1
      %p80 = por %p78, %p79
      %p82 = scmp.ne.s32.totalorder %s65, %s81
      %p83 = scmp.eq.s32.totalorder %s17, 0
      %p84 = por %p82, %p83
      %s85 = ssub.s32 %s18, %s30
      %p86 = scmp.eq.s32.totalorder %s85, 0
      %s88 = sadd.s32 %s87, 1
      %s89 = scalar_select %p86, %s87, %s88
      %p92 = pneg %p86
      %p93 = scmp.eq.s32.totalorder %s11, 1
      %p94 = por %p92, %p93
      %p95 = scmp.ne.s32.totalorder %s87, %s90
      %p96 = scmp.eq.s32.totalorder %s11, 0
      %p97 = por %p95, %p96
      %p98 = scmp.ne.s32.totalorder %s87, %s90
      %p99 = scmp.eq.s32.totalorder %s16, 1
      %p100 = por %p98, %p99
      %p101 = scmp.ne.s32.totalorder %s90, %s91
      %p102 = scmp.eq.s32.totalorder %s16, 0
      %p103 = por %p101, %p102
      %p104 = scmp.ne.s32.totalorder %s90, %s91
      %p105 = scmp.eq.s32.totalorder %s17, 1
      %p106 = por %p104, %p105
      %p108 = scmp.ne.s32.totalorder %s91, %s107
      %p109 = scmp.eq.s32.totalorder %s17, 0
      %p110 = por %p108, %p109
      %p111 = scmp.le.s32.totalorder 1, %s11
      %p112 = scmp.lt.s32.totalorder %s11, 3
      %p113 = pnand %p111, %p112
      %p114 = pneg %p113
      // Predicated region
      $region9: #{tpu_custom_call.1} parent=5 // pred_check
        _
      $region10: #{tpu_custom_call.1} parent=5 // pred_check_branch
        %116 = sbr.rel (%p113) target = $region12
      $region11: #{tpu_custom_call.1} parent=5 // pred_region
        %s117 = ssub.s32 %s11, 1
        // Predicated region
        $region13: #{tpu_custom_call.1} parent=11 // pred_check
          %p118 = pneg %p77
        $region14: #{tpu_custom_call.1} parent=11 // pred_check_branch
          %120 = sbr.rel (%p118) target = $region16
        $region15: #{tpu_custom_call.1} parent=11 // pred_region
          %s121 = smul.u32 32, %s21
          %p122 = scmp.lt.s32.totalorder %s121, 31
          %s123 = scalar_select %p122, %s121, 31
          %s124 = smul.addr %s123, 4
          %s125 = scalar_lea.vmem %s1, %s124
          %s126 = smul.u32 32, %s21
        $region16: #{tpu_custom_call.1} parent=11 // pred_fallthru
          _
      $region12: #{tpu_custom_call.1} parent=5 // pred_fallthru
        _
      %p127 = scmp.lt.s32.totalorder %s11, 2
      // Predicated region
      $region17: #{tpu_custom_call.1} parent=5 // pred_check
        %p128 = pneg %p127
      $region18: #{tpu_custom_call.1} parent=5 // pred_check_branch
        %130 = sbr.rel (%p128) target = $region20
      $region19: #{tpu_custom_call.1} parent=5 // pred_region
        // Predicated region
        $region21: #{tpu_custom_call.1} parent=19 // pred_check
          %p131 = pneg %p45
        $region22: #{tpu_custom_call.1} parent=19 // pred_check_branch
          %133 = sbr.rel (%p131) target = $region24
        $region23: #{tpu_custom_call.1} parent=19 // pred_region
          %s134 = smul.u32 2, %s19
          %p135 = scmp.lt.s32.totalorder %s18, 1
          %s136 = scalar_select %p135, %s18, 1
          %p137 = scmp.lt.s32.totalorder %s134, 1
          %s138 = scalar_select %p137, %s134, 1
          %s139 = smul.addr %s136, 2
          %s140 = sadd.s32 %s138, %s139
          %s141 = smul.addr %s140, 4
          %s142 = scalar_lea.vmem %s0, %s141
          %s143 = smul.u32 2, %s19
        $region24: #{tpu_custom_call.1} parent=19 // pred_fallthru
          _
      $region20: #{tpu_custom_call.1} parent=5 // pred_fallthru
        _
      %p144 = scmp.le.s32.totalorder 1, %s11
      %p145 = scmp.lt.s32.totalorder %s11, 3
      %p146 = pnand %p144, %p145
      %p147 = pneg %p146
      // Predicated region
      $region25: #{tpu_custom_call.1} parent=5 // pred_check
        _
      $region26: #{tpu_custom_call.1} parent=5 // pred_check_branch
        %149 = sbr.rel (%p146) target = $region28
      $region27: #{tpu_custom_call.1} parent=5 // pred_region
        %s150 = ssub.s32 %s11, 1
        %s151 = smul.u32 2, %s21
        %p152 = scmp.lt.s32.totalorder %s20, 1
        %s153 = scalar_select %p152, %s20, 1
        %p154 = scmp.lt.s32.totalorder %s151, 1
        %s155 = scalar_select %p154, %s151, 1
        %s156 = smul.addr %s153, 2
        %s157 = sadd.s32 %s155, %s156
        %s158 = smul.addr %s157, 4
        %s159 = scalar_lea.vmem %s0, %s158
        %p160 = pneg %p51
        %p161 = pneg %p48
        %s162 = smul.u32 32, %s21
        %p163 = scmp.lt.s32.totalorder %s162, 31
        %s164 = scalar_select %p163, %s162, 31
        %s165 = smul.addr %s164, 4
        %s166 = scalar_lea.vmem %s1, %s165
        %p167 = pneg %p77
        %p168 = pneg %p74
        %p169 = pneg %p103
        %p170 = pneg %p100
        %s171 = sand.u32 %s90, 1
        %s172 = scalar_lea.sflag [#allocation3], %s171
        %s173 = sand.u32 %s90, 1
        %s174 = smul.addr %s173, 8
        %s175 = scalar_lea.vmem [#allocation2], %s174
        %s176 = smul.u32 2, %s21
        %p177 = scmp.lt.s32.totalorder %s20, 1
        %s178 = scalar_select %p177, %s20, 1
        %p179 = scmp.lt.s32.totalorder %s176, 1
        %s180 = scalar_select %p179, %s176, 1
        %s181 = smul.addr %s178, 2
        %s182 = sadd.s32 %s180, %s181
        %s183 = smul.addr %s182, 4
        %s184 = scalar_lea.vmem %s0, %s183
        %s185 = smul.u32 2, %s21
        %s186 = smul.u32 32, %s21
        %p187 = scmp.lt.s32.totalorder %s186, 31
        %s188 = scalar_select %p187, %s186, 31
        %s189 = smul.addr %s188, 4
        %s190 = scalar_lea.vmem %s1, %s189
        %s191 = smul.u32 32, %s21
        %p192 = scmp.eq.s32.totalorder %s21, 0
        // Predicated region
        $region29: #{tpu_custom_call.1} parent=27 // pred_check
          %p193 = pneg %p192
        $region30: #{tpu_custom_call.1} parent=27 // pred_check_branch
          %195 = sbr.rel (%p193) target = $region32
        $region31: #{tpu_custom_call.1} parent=27 // pred_region
          %vm196 = vcmask 523264
          %197 = vst.msk [vmem:[%s175] sm:$0xff] %vm196, 0.0
        $region32: #{tpu_custom_call.1} parent=27 // pred_fallthru
          _
        %v198 = vld [vmem:[%s175] sm:$0xff]
        %v199 = vld [vmem:[%s184] sm:$0xff]
        %v200 = vld [vmem:[%s190] sm:$0xf]
        %v201 = vld [vmem:[%s190 + $0x4] sm:$0xf]
        %v202 = vld [vmem:[%s190 + $0x8] sm:$0xf]
        %v203 = vld [vmem:[%s190 + $0xc] sm:$0xf]
        %v204 = vld [vmem:[%s190 + $0x10] sm:$0xf]
        %v205 = vld [vmem:[%s190 + $0x14] sm:$0xf]
        %v206 = vld [vmem:[%s190 + $0x18] sm:$0xf]
        %v207 = vld [vmem:[%s190 + $0x1c] sm:$0xf]
        %v208 = vld [vmem:[%s190 + $0x20] sm:$0xf]
        %v209 = vld [vmem:[%s190 + $0x24] sm:$0xf]
        %v210 = vld [vmem:[%s190 + $0x28] sm:$0xf]
        %v211 = vld [vmem:[%s190 + $0x2c] sm:$0xf]
        %v212 = vld [vmem:[%s190 + $0x30] sm:$0xf]
        %v213 = vld [vmem:[%s190 + $0x34] sm:$0xf]
        %v214 = vld [vmem:[%s190 + $0x38] sm:$0xf]
        %v215 = vld [vmem:[%s190 + $0x3c] sm:$0xf]
        %v216 = vld [vmem:[%s190 + $0x40] sm:$0xf]
        %v217 = vld [vmem:[%s190 + $0x44] sm:$0xf]
        %v218 = vld [vmem:[%s190 + $0x48] sm:$0xf]
        %v219 = vld [vmem:[%s190 + $0x4c] sm:$0xf]
        %v220 = vld [vmem:[%s190 + $0x50] sm:$0xf]
        %v221 = vld [vmem:[%s190 + $0x54] sm:$0xf]
        %v222 = vld [vmem:[%s190 + $0x58] sm:$0xf]
        %v223 = vld [vmem:[%s190 + $0x5c] sm:$0xf]
        %v224 = vld [vmem:[%s190 + $0x60] sm:$0xf]
        %v225 = vld [vmem:[%s190 + $0x64] sm:$0xf]
        %v226 = vld [vmem:[%s190 + $0x68] sm:$0xf]
        %v227 = vld [vmem:[%s190 + $0x6c] sm:$0xf]
        %v228 = vld [vmem:[%s190 + $0x70] sm:$0xf]
        %v229 = vld [vmem:[%s190 + $0x74] sm:$0xf]
        %v230 = vld [vmem:[%s190 + $0x78] sm:$0xf]
        %v231 = vld [vmem:[%s190 + $0x7c] sm:$0xf]
        %v233 = vunpack.c.l.b16 %v199
        %v234 = vunpack.c.h.b16 %v199
        %v235 = vpack.c.b16 %v233, %v233
        %v236 = vpack.c.b16 %v234, %v234
        %v271 = vunpack.c.l.b16 %v200
        %v272 = vunpack.c.l.b16 %v201
        %v273 = vunpack.c.l.b16 %v202
        %v274 = vunpack.c.l.b16 %v203
        %v275 = vunpack.c.l.b16 %v204
        %v276 = vunpack.c.l.b16 %v205
        %v277 = vunpack.c.l.b16 %v206
        %v278 = vunpack.c.l.b16 %v207
        %v279 = vunpack.c.l.b16 %v208
        %v280 = vunpack.c.l.b16 %v209
        %v281 = vunpack.c.l.b16 %v210
        %v282 = vunpack.c.l.b16 %v211
        %v283 = vunpack.c.l.b16 %v212
        %v284 = vunpack.c.l.b16 %v213
        %v285 = vunpack.c.l.b16 %v214
        %v286 = vunpack.c.l.b16 %v215
        %v287 = vunpack.c.l.b16 %v216
        %v288 = vunpack.c.l.b16 %v217
        %v289 = vunpack.c.l.b16 %v218
        %v290 = vunpack.c.l.b16 %v219
        %v291 = vunpack.c.l.b16 %v220
        %v292 = vunpack.c.l.b16 %v221
        %v293 = vunpack.c.l.b16 %v222
        %v294 = vunpack.c.l.b16 %v223
        %v295 = vunpack.c.l.b16 %v224
        %v296 = vunpack.c.l.b16 %v225
        %v297 = vunpack.c.l.b16 %v226
        %v298 = vunpack.c.l.b16 %v227
        %v299 = vunpack.c.l.b16 %v228
        %v300 = vunpack.c.l.b16 %v229
        %v301 = vunpack.c.l.b16 %v230
        %v302 = vunpack.c.l.b16 %v231
        %v303 = vpack.c.b16 %v272, %v271
        %v304 = vpack.c.b16 %v274, %v273
        %v305 = vpack.c.b16 %v276, %v275
        %v306 = vpack.c.b16 %v278, %v277
        %v307 = vpack.c.b16 %v280, %v279
        %v308 = vpack.c.b16 %v282, %v281
        %v309 = vpack.c.b16 %v284, %v283
        %v310 = vpack.c.b16 %v286, %v285
        %v311 = vpack.c.b16 %v288, %v287
        %v312 = vpack.c.b16 %v290, %v289
        %v313 = vpack.c.b16 %v292, %v291
        %v314 = vpack.c.b16 %v294, %v293
        %v315 = vpack.c.b16 %v296, %v295
        %v316 = vpack.c.b16 %v298, %v297
        %v317 = vpack.c.b16 %v300, %v299
        %v318 = vpack.c.b16 %v302, %v301
        %335 = vmatpush.bf16.msra.mxu0 %v310
        %336 = vmatpush.bf16.msra.mxu0 %v309
        %337 = vmatpush.bf16.msra.mxu0 %v308
        %338 = vmatpush.bf16.msra.mxu0 %v307
        %339 = vmatpush.bf16.msra.mxu0 %v306
        %340 = vmatpush.bf16.msra.mxu0 %v305
        %341 = vmatpush.bf16.msra.mxu0 %v304
        %342 = vmatpush.bf16.msra.mxu0 %v303
        %343 = vmatmul.bf16.gmra.mxu0 %v235
        %v344 = vpop.f32.mrf.mxu0
        %v345 = vadd.f32 0.0, %v344
        %v346 = vpop.f32.mrf.mxu0
        %347 = vdwg.mxu0
        %348 = vmatpush.bf16.msra.mxu0 %v318
        %349 = vmatpush.bf16.msra.mxu0 %v317
        %350 = vmatpush.bf16.msra.mxu0 %v316
        %351 = vmatpush.bf16.msra.mxu0 %v315
        %352 = vmatpush.bf16.msra.mxu0 %v314
        %353 = vmatpush.bf16.msra.mxu0 %v313
        %354 = vmatpush.bf16.msra.mxu0 %v312
        %355 = vmatpush.bf16.msra.mxu0 %v311
        %356 = vmatmul.bf16.gmra.mxu0 %v236
        %v357 = vpop.f32.mrf.mxu0
        %v358 = vadd.f32 %v345, %v357
        %v359 = vpop.f32.mrf.mxu0
        %360 = vdwg.mxu0
        %v361 = vadd.f32 %v198, %v358
        %vm362 = vcmask 523264
        %363 = vst.msk [vmem:[%s175] sm:$0xff] %vm362, %v361
        %s364 = sand.u32 %s90, 1
        %s365 = scalar_lea.sflag [#allocation3], %s364
        %s366 = sand.u32 %s90, 1
        %s367 = smul.addr %s366, 8
        %s368 = scalar_lea.vmem [#allocation2], %s367
        // Predicated region
        $region33: #{tpu_custom_call.1} parent=27 // pred_check
          %p369 = pneg %p100
        $region34: #{tpu_custom_call.1} parent=27 // pred_check_branch
          %371 = sbr.rel (%p369) target = $region36
        $region35: #{tpu_custom_call.1} parent=27 // pred_region
          %373 = vsyncadd %s365, 0
          %s374 = smul.addr %s20, 8
          %s375 = scalar_lea.hbm %s2, %s374
          %s377 = sshll.u32 %s368, 4
          %s378 = int_to_ptr.vmem [resolvable:$true] %s377
          %s379 = sshll.u32 %s375, 4
          %s380 = int_to_ptr.hbm [resolvable:$true] %s379
          %382 = dma.vmem_to_hbm [thread:$0]  %s378, 128, %s380, %s365
        $region36: #{tpu_custom_call.1} parent=27 // pred_fallthru
          _
      $region28: #{tpu_custom_call.1} parent=5 // pred_fallthru
        _
      %p383 = scmp.le.s32.totalorder 2, %s11
      // Predicated region
      $region37: #{tpu_custom_call.1} parent=5 // pred_check
        %p384 = pneg %p383
      $region38: #{tpu_custom_call.1} parent=5 // pred_check_branch
        %386 = sbr.rel (%p384) target = $region40
      $region39: #{tpu_custom_call.1} parent=5 // pred_region
        %s387 = ssub.s32 %s11, 2
        // Predicated region
        $region41: #{tpu_custom_call.1} parent=39 // pred_check
          %p388 = pneg %p106
        $region42: #{tpu_custom_call.1} parent=39 // pred_check_branch
          %390 = sbr.rel (%p388) target = $region44
        $region43: #{tpu_custom_call.1} parent=39 // pred_region
          %s391 = sand.u32 %s91, 1
          %s392 = scalar_lea.sflag [#allocation3], %s391
          %s393 = sand.u32 %s91, 1
          %s394 = smul.addr %s393, 8
          %s395 = scalar_lea.vmem [#allocation2], %s394
          %397 = dma.done %s392, 128
        $region44: #{tpu_custom_call.1} parent=39 // pred_fallthru
          _
      $region40: #{tpu_custom_call.1} parent=5 // pred_fallthru
        _
    $region6: #{tpu_custom_call.1} parent=1 // loop_footer
      %s15 = sadd.s32 1, %s11
    $region7: #{tpu_custom_call.1} parent=1 // loop_footer_branch
      %10 = sbr.rel target = $region3
    $region8: #{tpu_custom_call.1} parent=1 // loop_exit
      _
    %398 = vsyncpa [#allocation3], 1
    %s399 = scalar_lea.sflag [#allocation3], 1
    %400 = vsyncpa %s399, 1

</llo_original>
